<compile_context>
chip_gen: v7x
topology: tpu7x:2x2x1
jax: 0.10.0
libtpu: 0.0.40
codegen_flags: <defaults>
</compile_context>

<pallas_src>
import functools

import numpy as np
import jax
import jax.numpy as jnp
from jax import lax
from jax.experimental import pallas as pl
from jax.experimental.pallas import tpu as pltpu

EMBED_DIM = 512
BN_EPS = 1e-5


def _pick_vmem_limit():
    # 48 MiB is safe on v5e/v6e (128 MiB physical); v7x only has 64 MiB per TC
    # so cap at ~45% of capacity there.
    try:
        cap = pltpu.get_tpu_info().vmem_capacity_bytes
    except Exception:
        cap = 64 * 1024 * 1024
    return min(48 * 1024 * 1024, int(cap * 0.45))


VMEM_LIMIT = _pick_vmem_limit()


# ----------------------------- Pallas kernels -----------------------------

def _mm_bias_kernel(a_ref, b_ref, c_ref, o_ref, *, relu):
    """out = act(a @ b + bias).  a,b bf16; accumulate f32."""
    y = jnp.dot(a_ref[...], b_ref[...], preferred_element_type=jnp.float32)
    y = y + c_ref[...]
    if relu:
        y = jnp.maximum(y, 0.0)
    o_ref[...] = y.astype(o_ref.dtype)


def _mm_bias_res_kernel(a_ref, b_ref, c_ref, r_ref, o_ref, *, relu):
    """out = act(a @ b + bias + residual)."""
    y = jnp.dot(a_ref[...], b_ref[...], preferred_element_type=jnp.float32)
    y = y + c_ref[...] + r_ref[...].astype(jnp.float32)
    if relu:
        y = jnp.maximum(y, 0.0)
    o_ref[...] = y.astype(o_ref.dtype)


def _conv3x3_s1_kernel(x_ref, w_ref, b_ref, o_ref, *, relu):
    """Fused 3x3 stride-1 conv + BN-bias + ReLU for one image.

    x_ref: (H+2, W+2, C) padded input (bf16), w_ref: (3, 3, C, Cout) bf16,
    b_ref: (1, Cout) f32, o_ref: (H, W, Cout) bf16.
    The 9 taps are accumulated in an f32 accumulator entirely in VMEM — no
    im2col tensor ever touches HBM.
    """
    hp, wp, c = x_ref.shape
    h, w = hp - 2, wp - 2
    cout = o_ref.shape[-1]
    acc = jnp.zeros((h * w, cout), jnp.float32)
    for i in range(3):
        for j in range(3):
            patch = x_ref[i:i + h, j:j + w, :].reshape(h * w, c)
            acc = acc + jnp.dot(patch, w_ref[i, j],
                                preferred_element_type=jnp.float32)
    y = acc + b_ref[...]
    if relu:
        y = jnp.maximum(y, 0.0)
    o_ref[...] = y.reshape(h, w, cout).astype(o_ref.dtype)


def _max_reduce_kernel(x_ref, o_ref):
    o_ref[...] = jnp.max(x_ref[...], axis=0).astype(o_ref.dtype)


def _avg_reduce_kernel(x_ref, o_ref, *, inv_n):
    s = jnp.sum(x_ref[...].astype(jnp.float32), axis=0, keepdims=True)
    o_ref[...] = (s * inv_n).astype(o_ref.dtype)


# ----------------------------- matmul wrapper -----------------------------

def matmul_bias(a, b, bias, res=None, relu=False, out_dtype=jnp.bfloat16):
    """act(a @ b + bias [+ res]).  a:(M,K) bf16, b:(K,N) bf16, bias:(N,) f32."""
    M, K = a.shape
    N = b.shape[1]
    bm = 256 if M > 256 else M          # full block for small M, 256-row tiles else
    grid = (pl.cdiv(M, bm),)
    in_specs = [
        pl.BlockSpec((bm, K), lambda i: (i, 0)),
        pl.BlockSpec((K, N), lambda i: (0, 0)),
        pl.BlockSpec((1, N), lambda i: (0, 0)),
    ]
    args = [a, b, bias.reshape(1, N).astype(jnp.float32)]
    if res is not None:
        in_specs.append(pl.BlockSpec((bm, N), lambda i: (i, 0)))
        args.append(res)
        kernel = functools.partial(_mm_bias_res_kernel, relu=relu)
    else:
        kernel = functools.partial(_mm_bias_kernel, relu=relu)
    return pl.pallas_call(
        kernel,
        out_shape=jax.ShapeDtypeStruct((M, N), out_dtype),
        grid=grid,
        in_specs=in_specs,
        out_specs=pl.BlockSpec((bm, N), lambda i: (i, 0)),
        compiler_params=pltpu.CompilerParams(
            dimension_semantics=("parallel",),
            vmem_limit_bytes=VMEM_LIMIT),
    )(*args)


# ----------------------------- layer wrappers -----------------------------

@functools.partial(jax.jit, static_argnames=("k", "s", "p", "relu"))
def conv_bn_act(x, w, bias, res, *, k, s, p, relu):
    """conv(kxk, stride s, pad p) + BN-bias + optional residual + ReLU.

    Used for the 7x7 stem, 1x1 convs and the 3 stride-2 3x3 convs (im2col on
    these is cheap; 3x3 stride-1 convs go through conv3x3_s1_bn instead).
    x: (N, H, W, C) bf16, w: (k, k, C, Cout) bf16 (BN scale pre-folded),
    bias: (Cout,) f32, res: None or (N, Ho, Wo, Cout) bf16.
    """
    N, H, W, C = x.shape
    Ho = (H + 2 * p - k) // s + 1
    Wo = (W + 2 * p - k) // s + 1
    cout = w.shape[-1]
    xp = jnp.pad(x, ((0, 0), (p, p), (p, p), (0, 0))) if p > 0 else x
    cols = [
        lax.slice(xp, (0, i, j, 0),
                  (N, i + (Ho - 1) * s + 1, j + (Wo - 1) * s + 1, C),
                  (1, s, s, 1))
        for i in range(k) for j in range(k)
    ]
    patches = cols[0] if len(cols) == 1 else jnp.concatenate(cols, axis=-1)
    a = patches.reshape(N * Ho * Wo, k * k * C)
    b = w.reshape(k * k * C, cout)
    r = None if res is None else res.reshape(N * Ho * Wo, cout)
    out = matmul_bias(a, b, bias, r, relu=relu)
    return out.reshape(N, Ho, Wo, cout)


@functools.partial(jax.jit, static_argnames=("relu",))
def conv3x3_s1_bn(x, w, bias, *, relu):
    """Fused 3x3 stride-1 conv + BN-bias + ReLU, no HBM im2col.

    Grid over batch; the padded image for one example lives in VMEM and the
    9 shifted matmuls accumulate on-chip.
    """
    N, H, W, C = x.shape
    cout = w.shape[-1]
    xp = jnp.pad(x, ((0, 0), (1, 1), (1, 1), (0, 0)))
    return pl.pallas_call(
        functools.partial(_conv3x3_s1_kernel, relu=relu),
        out_shape=jax.ShapeDtypeStruct((N, H, W, cout), jnp.bfloat16),
        grid=(N,),
        in_specs=[
            pl.BlockSpec((None, H + 2, W + 2, C), lambda n: (n, 0, 0, 0)),
            pl.BlockSpec((3, 3, C, cout), lambda n: (0, 0, 0, 0)),
            pl.BlockSpec((1, cout), lambda n: (0, 0)),
        ],
        out_specs=pl.BlockSpec((None, H, W, cout), lambda n: (n, 0, 0, 0)),
        compiler_params=pltpu.CompilerParams(
            dimension_semantics=("parallel",),
            vmem_limit_bytes=VMEM_LIMIT),
    )(xp, w, bias.reshape(1, cout).astype(jnp.float32))


@jax.jit
def maxpool_3x3_s2_p1(x):
    """MaxPool2d(kernel=3, stride=2, padding=1) in NHWC, tiled over rows."""
    N, H, W, C = x.shape
    k, s, p = 3, 2, 1
    Ho = (H + 2 * p - k) // s + 1
    Wo = (W + 2 * p - k) // s + 1
    xp = jnp.pad(x, ((0, 0), (p, p), (p, p), (0, 0)),
                 constant_values=-jnp.inf)
    cols = [
        lax.slice(xp, (0, i, j, 0),
                  (N, i + (Ho - 1) * s + 1, j + (Wo - 1) * s + 1, C),
                  (1, s, s, 1))
        for i in range(k) for j in range(k)
    ]
    M = N * Ho * Wo
    stacked = jnp.stack(cols, axis=0).reshape(k * k, M, C)
    bm = 512 if M > 512 else M
    out = pl.pallas_call(
        _max_reduce_kernel,
        out_shape=jax.ShapeDtypeStruct((M, C), jnp.bfloat16),
        grid=(pl.cdiv(M, bm),),
        in_specs=[pl.BlockSpec((k * k, bm, C), lambda i: (0, i, 0))],
        out_specs=pl.BlockSpec((bm, C), lambda i: (i, 0)),
        compiler_params=pltpu.CompilerParams(
            dimension_semantics=("parallel",),
            vmem_limit_bytes=VMEM_LIMIT),
    )(stacked)
    return out.reshape(N, Ho, Wo, C)


@jax.jit
def global_avgpool(x):
    """AdaptiveAvgPool2d((1,1)) + flatten; grid over batch, reduce over HW."""
    N, H, W, C = x.shape
    hw = H * W
    xs = x.reshape(N, hw, C)
    out = pl.pallas_call(
        functools.partial(_avg_reduce_kernel, inv_n=1.0 / hw),
        out_shape=jax.ShapeDtypeStruct((N, 1, C), jnp.float32),
        grid=(N,),
        in_specs=[pl.BlockSpec((None, hw, C), lambda n: (n, 0, 0))],
        out_specs=pl.BlockSpec((None, 1, C), lambda n: (n, 0, 0)),
        compiler_params=pltpu.CompilerParams(
            dimension_semantics=("parallel",),
            vmem_limit_bytes=VMEM_LIMIT),
    )(xs)
    return out.reshape(N, C)


@jax.jit
def linear(x, w, b):
    """nn.Linear(2048, 512): x @ w + b  (w already transposed to (in, out))."""
    return matmul_bias(x.astype(jnp.bfloat16), w, b, None, relu=False,
                       out_dtype=jnp.float32)


# ----------------------------- parameters -----------------------------

def make_params(key):
    counter = [0]

    def next_key():
        counter[0] += 1
        return jax.random.fold_in(key, counter[0])

    def conv_p(cin, cout, k):
        fan_in = cin * k * k
        w = jax.random.normal(next_key(), (k, k, cin, cout),
                              jnp.float32) / np.sqrt(fan_in)
        gamma = 1.0 + 0.1 * jax.random.normal(next_key(), (cout,), jnp.float32)
        beta = 0.1 * jax.random.normal(next_key(), (cout,), jnp.float32)
        # BN eval mode (running_mean=0, running_var=1) folded directly into the
        # conv weights; only the additive bias remains for the kernel.
        scale = gamma * (1.0 / np.sqrt(1.0 + BN_EPS))
        w = (w * scale[None, None, None, :]).astype(jnp.bfloat16)
        return {"w": w, "bias": beta}

    params = {"stem": conv_p(3, 64, 7)}

    layers = []
    in_c = 64
    stage_cfg = [(64, 3, 1), (128, 8, 2), (256, 36, 2), (512, 3, 2)]  # ResNet-152
    for width, nblocks, stride in stage_cfg:
        out_c = width * 4
        blocks = []
        for b in range(nblocks):
            s = stride if b == 0 else 1
            blk = {
                "stride": s,
                "conv1": conv_p(in_c, width, 1),
                "conv2": conv_p(width, width, 3),
                "conv3": conv_p(width, out_c, 1),
            }
            if b == 0:
                blk["down"] = conv_p(in_c, out_c, 1)
            blocks.append(blk)
            in_c = out_c
        layers.append(blocks)
    params["layers"] = layers

    # self.linear.weight ~ N(0, 0.02), bias = 0 (matches init_weights()).
    fc_w = 0.02 * jax.random.normal(next_key(), (EMBED_DIM, 2048), jnp.float32)
    params["fc"] = {"w": fc_w.T.astype(jnp.bfloat16),
                    "b": jnp.zeros((EMBED_DIM,), jnp.float32)}
    return params


# ----------------------------- forward pass -----------------------------

def resnet152_forward(params, images_nchw):
    # layout: input is NCHW (PyTorch convention); compute runs in NHWC / bf16.
    x = jnp.transpose(images_nchw, (0, 2, 3, 1)).astype(jnp.bfloat16)

    st = params["stem"]
    x = conv_bn_act(x, st["w"], st["bias"], None, k=7, s=2, p=3, relu=True)
    x = maxpool_3x3_s2_p1(x)

    for blocks in params["layers"]:
        for blk in blocks:
            s = blk["stride"]
            if "down" in blk:
                d = blk["down"]
                identity = conv_bn_act(x, d["w"], d["bias"], None,
                                       k=1, s=s, p=0, relu=False)
            else:
                identity = x
            c1, c2, c3 = blk["conv1"], blk["conv2"], blk["conv3"]
            out = conv_bn_act(x, c1["w"], c1["bias"], None,
                              k=1, s=1, p=0, relu=True)
            if s == 1:
                # Fused 3x3 conv with in-VMEM tap accumulation (no HBM im2col).
                out = conv3x3_s1_bn(out, c2["w"], c2["bias"], relu=True)
            else:
                out = conv_bn_act(out, c2["w"], c2["bias"], None,
                                  k=3, s=s, p=1, relu=True)
            # conv3 + BN-bias + residual add + ReLU fused in one kernel call.
            x = conv_bn_act(out, c3["w"], c3["bias"], identity,
                            k=1, s=1, p=0, relu=True)

    pooled = global_avgpool(x)                                    # (N, 2048) f32
    embed = linear(pooled, params["fc"]["w"], params["fc"]["b"])  # (N, 512) f32
    return embed


# ----------------------------- main -----------------------------

if __name__ == "__main__":
    key = jax.random.PRNGKey(0)
    params = make_params(key)

    # Small, deterministic input: batch=2, 3 channels, 32x32 spatial (NCHW,
    # like the PyTorch module's `images` argument).
    images = jax.random.normal(jax.random.fold_in(key, 12345),
                               (2, 3, 32, 32), jnp.float32)

    embed = resnet152_forward(params, images)
    embed = jax.block_until_ready(embed)

    assert embed.shape == (2, EMBED_DIM), embed.shape
    assert bool(jnp.all(jnp.isfinite(embed)))
    print("KERNEL_OK")
</pallas_src>

<mosaic_0001>
module attributes {stable_mosaic.version = 11 : i64} {
  func.func @_mm_bias_kernel(%arg0: i32, %arg1: memref<256x147xbf16, #tpu.memory_space<vmem>>, %arg2: memref<147x64xbf16, #tpu.memory_space<vmem>>, %arg3: memref<1x64xf32, #tpu.memory_space<vmem>>, %arg4: memref<256x64xbf16, #tpu.memory_space<vmem>>) attributes {dimension_semantics = [#tpu.dimension_semantics<parallel>], iteration_bounds = array<i64: 2>, scalar_prefetch = 0 : i64, scratch_operands = 0 : i64, tpu.core_type = #tpu.core_type<tc>, window_params = [{transform_indices = @transform_0, window_bounds = array<i64: 256, 147>}, {pipeline_mode = #tpu.pipeline_mode<synchronous>, transform_indices = @transform_1, window_bounds = array<i64: 147, 64>}, {pipeline_mode = #tpu.pipeline_mode<synchronous>, transform_indices = @transform_2, window_bounds = array<i64: 1, 64>}, {transform_indices = @transform_3, window_bounds = array<i64: 256, 64>}]} {
    %c0 = arith.constant 0 : index
    %c0_0 = arith.constant 0 : index
    %0 = vector.load %arg1[%c0, %c0_0] : memref<256x147xbf16, #tpu.memory_space<vmem>>, vector<256x147xbf16>
    %c0_1 = arith.constant 0 : index
    %c0_2 = arith.constant 0 : index
    %1 = vector.load %arg2[%c0_1, %c0_2] : memref<147x64xbf16, #tpu.memory_space<vmem>>, vector<147x64xbf16>
    %cst = arith.constant dense<0.000000e+00> : vector<256x64xf32>
    %2 = tpu.matmul %0, %1, %cst {dimension_numbers = #tpu.dot_dimension_numbers<[1], [0], [0], [1], [0, 0, 1, 1], [], []>} : vector<256x147xbf16>, vector<147x64xbf16>, vector<256x64xf32> -> vector<256x64xf32>
    %c0_3 = arith.constant 0 : index
    %c0_4 = arith.constant 0 : index
    %3 = vector.load %arg3[%c0_3, %c0_4] : memref<1x64xf32, #tpu.memory_space<vmem>>, vector<1x64xf32>
    %4 = vector.broadcast %3 : vector<1x64xf32> to vector<256x64xf32>
    %5 = arith.addf %2, %4 : vector<256x64xf32>
    %cst_5 = arith.constant 0.000000e+00 : f32
    %6 = vector.broadcast %cst_5 : f32 to vector<256x64xf32>
    %7 = arith.maximumf %5, %6 : vector<256x64xf32>
    %8 = arith.truncf %7 : vector<256x64xf32> to vector<256x64xbf16>
    %c0_6 = arith.constant 0 : index
    %c0_7 = arith.constant 0 : index
    %9 = vector.load %arg4[%c0_6, %c0_7] : memref<256x64xbf16, #tpu.memory_space<vmem>>, vector<256x64xbf16>
    tpu.vector_store %arg4[%c0_6, %c0_7], %8 {strides = array<i32>} : memref<256x64xbf16, #tpu.memory_space<vmem>>, vector<256x64xbf16>,
    return
  }
  func.func @transform_0(%arg0: i32) -> (i32, i32) {
    %c0_i32 = arith.constant 0 : i32
    %c0_i32_0 = arith.constant 0 : i32
    return %arg0, %c0_i32 : i32, i32
  }
  func.func @transform_1(%arg0: i32) -> (i32, i32) {
    %c0_i32 = arith.constant 0 : i32
    %c0_i32_0 = arith.constant 0 : i32
    %c0_i32_1 = arith.constant 0 : i32
    return %c0_i32, %c0_i32_0 : i32, i32
  }
  func.func @transform_2(%arg0: i32) -> (i32, i32) {
    %c0_i32 = arith.constant 0 : i32
    %c0_i32_0 = arith.constant 0 : i32
    %c0_i32_1 = arith.constant 0 : i32
    return %c0_i32, %c0_i32_0 : i32, i32
  }
  func.func @transform_3(%arg0: i32) -> (i32, i32) {
    %c0_i32 = arith.constant 0 : i32
    %c0_i32_0 = arith.constant 0 : i32
    return %arg0, %c0_i32 : i32, i32
  }
}

</mosaic_0001>

<llo_original>
// kernel: conv_bn_act.1
$region0: #{conv_bn_act.1}
  #allocation0 [shape = 'u32[]', space=smem, size = 0x4, offset = 0x4, fixed_abs, tag = 'smem constant byte address 0x4 - core index']
  #allocation1 [shape = 'u32[144,128]{1,0:T(1,128)}', space=vmem, size = 0x12000, scoped, tag = 'internal scratch']
  %s0 = inlined_call_operand.vmem [shape: bf16[512,147], index: 0, kind: input, shape index: {}]
  %s1 = inlined_call_operand.vmem [shape: bf16[147,64], index: 1, kind: input, shape index: {}]
  %s2 = inlined_call_operand.vmem [shape: f32[1,64], index: 2, kind: input, shape index: {}]
  %s3 = inlined_call_operand.hbm [shape: bf16[512,64], index: 3, kind: output, shape index: {}]
  %s4 = sld [smem:[#allocation0]]
  $region45: #{conv_bn_act.1} parent=0
    _
  %s6 = ssub.s32 1, %s4
  %s7 = scalar_select 0, %s6, %s4
  $region1: #{conv_bn_act.1} parent=0
    #allocation2 [shape = 'u8[131072]{0}', space=vmem, size = 0x20000, scoped, tag = 'output window, operand 0']
    #allocation3 [shape = 's32[2]{0}', space=sflag, size = 0x8, scoped, tag = 'scoped memory for conv_bn_act.1']
    %8 = vsyncpa [#allocation3], 0
    %s9 = scalar_lea.sflag [#allocation3], 1
    %10 = vsyncpa %s9, 0
    loop: start=0, step=1, limit=4
    $region2: #{conv_bn_act.1} parent=1 // loop_pre_header
      _
    $region3: #{conv_bn_act.1} parent=1 // loop_header
      %s12 = sphi 0, %s16
      %p13 = scmp.ge.s32.totalorder %s12, 4
      %s22 = sphi 0, %s24
      %s25 = sphi 0, %s22
      %s26 = sphi 0, %s25
      %s42 = sphi 0, %s26
      %s46 = sphi 0, %s46
      %s48 = sphi 0, %s46
      %s49 = sphi 0, %s48
      %s63 = sphi 0, %s49
      %s67 = sphi 0, %s67
      %s69 = sphi 0, %s67
      %s70 = sphi 0, %s69
      %s84 = sphi 0, %s70
      %s90 = sphi 0, %s92
      %s93 = sphi 0, %s90
      %s94 = sphi 0, %s93
      %s110 = sphi 0, %s94
    $region4: #{conv_bn_act.1} parent=1 // loop_header_branch
      %15 = sbr.rel (%p13) target = $region8
    $region5: #{conv_bn_act.1} parent=1 // loop_body
      %s17 = ssub.s32 %s12, 1
      %s18 = ssub.s32 %s12, 2
      %s19 = sadd.s32 %s12, 1
      %s20 = ssub.s32 %s12, %s19
      %p21 = scmp.eq.s32.totalorder %s20, 0
      %s23 = sadd.s32 %s22, 1
      %s24 = scalar_select %p21, %s22, %s23
      %p27 = pneg %p21
      %p28 = scmp.eq.s32.totalorder %s12, 1
      %p29 = por %p27, %p28
      %p30 = scmp.ne.s32.totalorder %s22, %s25
      %p31 = scmp.eq.s32.totalorder %s12, 0
      %p32 = por %p30, %p31
      %p33 = scmp.ne.s32.totalorder %s22, %s25
      %p34 = scmp.eq.s32.totalorder %s17, 1
      %p35 = por %p33, %p34
      %p36 = scmp.ne.s32.totalorder %s25, %s26
      %p37 = scmp.eq.s32.totalorder %s17, 0
      %p38 = por %p36, %p37
      %p39 = scmp.ne.s32.totalorder %s25, %s26
      %p40 = scmp.eq.s32.totalorder %s18, 1
      %p41 = por %p39, %p40
      %p43 = scmp.ne.s32.totalorder %s26, %s42
      %p44 = scmp.eq.s32.totalorder %s18, 0
      %p45 = por %p43, %p44
      %s47 = sadd.s32 %s46, 1
      %p50 = scmp.eq.s32.totalorder %s12, 1
      %p51 = scmp.ne.s32.totalorder %s46, %s48
      %p52 = scmp.eq.s32.totalorder %s12, 0
      %p53 = por %p51, %p52
      %p54 = scmp.ne.s32.totalorder %s46, %s48
      %p55 = scmp.eq.s32.totalorder %s17, 1
      %p56 = por %p54, %p55
      %p57 = scmp.ne.s32.totalorder %s48, %s49
      %p58 = scmp.eq.s32.totalorder %s17, 0
      %p59 = por %p57, %p58
      %p60 = scmp.ne.s32.totalorder %s48, %s49
      %p61 = scmp.eq.s32.totalorder %s18, 1
      %p62 = por %p60, %p61
      %p64 = scmp.ne.s32.totalorder %s49, %s63
      %p65 = scmp.eq.s32.totalorder %s18, 0
      %p66 = por %p64, %p65
      %s68 = sadd.s32 %s67, 1
      %p71 = scmp.eq.s32.totalorder %s12, 1
      %p72 = scmp.ne.s32.totalorder %s67, %s69
      %p73 = scmp.eq.s32.totalorder %s12, 0
      %p74 = por %p72, %p73
      %p75 = scmp.ne.s32.totalorder %s67, %s69
      %p76 = scmp.eq.s32.totalorder %s17, 1
      %p77 = por %p75, %p76
      %p78 = scmp.ne.s32.totalorder %s69, %s70
      %p79 = scmp.eq.s32.totalorder %s17, 0
      %p80 = por %p78, %p79
      %p81 = scmp.ne.s32.totalorder %s69, %s70
      %p82 = scmp.eq.s32.totalorder %s18, 1
      %p83 = por %p81, %p82
      %p85 = scmp.ne.s32.totalorder %s70, %s84
      %p86 = scmp.eq.s32.totalorder %s18, 0
      %p87 = por %p85, %p86
      %s88 = ssub.s32 %s12, %s19
      %p89 = scmp.eq.s32.totalorder %s88, 0
      %s91 = sadd.s32 %s90, 1
      %s92 = scalar_select %p89, %s90, %s91
      %p95 = pneg %p89
      %p96 = scmp.eq.s32.totalorder %s12, 1
      %p97 = por %p95, %p96
      %p98 = scmp.ne.s32.totalorder %s90, %s93
      %p99 = scmp.eq.s32.totalorder %s12, 0
      %p100 = por %p98, %p99
      %p101 = scmp.ne.s32.totalorder %s90, %s93
      %p102 = scmp.eq.s32.totalorder %s17, 1
      %p103 = por %p101, %p102
      %p104 = scmp.ne.s32.totalorder %s93, %s94
      %p105 = scmp.eq.s32.totalorder %s17, 0
      %p106 = por %p104, %p105
      %p107 = scmp.ne.s32.totalorder %s93, %s94
      %p108 = scmp.eq.s32.totalorder %s18, 1
      %p109 = por %p107, %p108
      %p111 = scmp.ne.s32.totalorder %s94, %s110
      %p112 = scmp.eq.s32.totalorder %s18, 0
      %p113 = por %p111, %p112
      %p114 = scmp.le.s32.totalorder 1, %s12
      %p115 = scmp.lt.s32.totalorder %s12, 3
      %p116 = pnand %p114, %p115
      %p117 = pneg %p116
      // Predicated region
      $region9: #{conv_bn_act.1} parent=5 // pred_check
        _
      $region10: #{conv_bn_act.1} parent=5 // pred_check_branch
        %119 = sbr.rel (%p116) target = $region12
      $region11: #{conv_bn_act.1} parent=5 // pred_region
        %s120 = ssub.s32 %s12, 1
        // Predicated region
        $region13: #{conv_bn_act.1} parent=11 // pred_check
          %p121 = pneg %p59
        $region14: #{conv_bn_act.1} parent=11 // pred_check_branch
          %123 = sbr.rel (%p121) target = $region16
        $region15: #{conv_bn_act.1} parent=11 // pred_region
          _
        $region16: #{conv_bn_act.1} parent=11 // pred_fallthru
          _
        // Predicated region
        $region17: #{conv_bn_act.1} parent=11 // pred_check
          %p124 = pneg %p80
        $region18: #{conv_bn_act.1} parent=11 // pred_check_branch
          %126 = sbr.rel (%p124) target = $region20
        $region19: #{conv_bn_act.1} parent=11 // pred_region
          _
        $region20: #{conv_bn_act.1} parent=11 // pred_fallthru
          _
      $region12: #{conv_bn_act.1} parent=5 // pred_fallthru
        _
      %p127 = scmp.lt.s32.totalorder %s12, 2
      // Predicated region
      $region21: #{conv_bn_act.1} parent=5 // pred_check
        %p128 = pneg %p127
      $region22: #{conv_bn_act.1} parent=5 // pred_check_branch
        %130 = sbr.rel (%p128) target = $region24
      $region23: #{conv_bn_act.1} parent=5 // pred_region
        // Predicated region
        $region25: #{conv_bn_act.1} parent=23 // pred_check
          %p131 = pneg %p32
        $region26: #{conv_bn_act.1} parent=23 // pred_check_branch
          %133 = sbr.rel (%p131) target = $region28
        $region27: #{conv_bn_act.1} parent=23 // pred_region
          %s134 = smul.u32 32, %s12
          %p135 = scmp.lt.s32.totalorder %s134, 63
          %s136 = scalar_select %p135, %s134, 63
          %s137 = smul.addr %s136, 2
          %s138 = smul.addr %s137, 4
          %s139 = scalar_lea.vmem %s0, %s138
          %s140 = smul.u32 32, %s12
        $region28: #{conv_bn_act.1} parent=23 // pred_fallthru
          _
      $region24: #{conv_bn_act.1} parent=5 // pred_fallthru
        _
      %p141 = scmp.le.s32.totalorder 1, %s12
      %p142 = scmp.lt.s32.totalorder %s12, 3
      %p143 = pnand %p141, %p142
      %p144 = pneg %p143
      // Predicated region
      $region29: #{conv_bn_act.1} parent=5 // pred_check
        _
      $region30: #{conv_bn_act.1} parent=5 // pred_check_branch
        %146 = sbr.rel (%p143) target = $region32
      $region31: #{conv_bn_act.1} parent=5 // pred_region
        %s147 = ssub.s32 %s12, 1
        %s148 = smul.u32 32, %s17
        %p149 = scmp.lt.s32.totalorder %s148, 63
        %s150 = scalar_select %p149, %s148, 63
        %s151 = smul.addr %s150, 2
        %s152 = smul.addr %s151, 4
        %s153 = scalar_lea.vmem %s0, %s152
        %p154 = pneg %p38
        %p155 = pneg %p35
        %p156 = pneg %p59
        %p157 = pneg %p56
        %p158 = pneg %p80
        %p159 = pneg %p77
        %p160 = pneg %p106
        %p161 = pneg %p103
        %s162 = sand.u32 %s93, 1
        %s163 = scalar_lea.sflag [#allocation3], %s162
        %s164 = sand.u32 %s93, 1
        %s165 = smul.addr %s164, 128
        %s166 = scalar_lea.vmem [#allocation2], %s165
        %s167 = smul.u32 32, %s17
        %p168 = scmp.lt.s32.totalorder %s167, 63
        %s169 = scalar_select %p168, %s167, 63
        %s170 = smul.addr %s169, 2
        %s171 = smul.addr %s170, 4
        %s172 = scalar_lea.vmem %s0, %s171
        %s173 = smul.u32 32, %s17
        %s174 = smul.u32 32, %s17
        %v176 = vld [vmem:[%s172] sm:$0xff]
        %v177 = vld [vmem:[%s172 + $0x8] sm:$0xff]
        %v178 = vld [vmem:[%s172 + $0x10] sm:$0xff]
        %v179 = vld [vmem:[%s172 + $0x18] sm:$0xff]
        %v180 = vld [vmem:[%s172 + $0x20] sm:$0xff]
        %v181 = vld [vmem:[%s172 + $0x28] sm:$0xff]
        %v182 = vld [vmem:[%s172 + $0x30] sm:$0xff]
        %v183 = vld [vmem:[%s172 + $0x38] sm:$0xff]
        %v184 = vld [vmem:[%s172 + $0x40] sm:$0xff]
        %v185 = vld [vmem:[%s172 + $0x48] sm:$0xff]
        %v186 = vld [vmem:[%s172 + $0x50] sm:$0xff]
        %v187 = vld [vmem:[%s172 + $0x58] sm:$0xff]
        %v188 = vld [vmem:[%s172 + $0x60] sm:$0xff]
        %v189 = vld [vmem:[%s172 + $0x68] sm:$0xff]
        %v190 = vld [vmem:[%s172 + $0x70] sm:$0xff]
        %v191 = vld [vmem:[%s172 + $0x78] sm:$0xff]
        %v192 = vld [vmem:[%s172 + $0x80] sm:$0xff]
        %v193 = vld [vmem:[%s172 + $0x88] sm:$0xff]
        %v194 = vld [vmem:[%s172 + $0x90] sm:$0xff]
        %v195 = vld [vmem:[%s172 + $0x98] sm:$0xff]
        %v196 = vld [vmem:[%s172 + $0xa0] sm:$0xff]
        %v197 = vld [vmem:[%s172 + $0xa8] sm:$0xff]
        %v198 = vld [vmem:[%s172 + $0xb0] sm:$0xff]
        %v199 = vld [vmem:[%s172 + $0xb8] sm:$0xff]
        %v200 = vld [vmem:[%s172 + $0xc0] sm:$0xff]
        %v201 = vld [vmem:[%s172 + $0xc8] sm:$0xff]
        %v202 = vld [vmem:[%s172 + $0xd0] sm:$0xff]
        %v203 = vld [vmem:[%s172 + $0xd8] sm:$0xff]
        %v204 = vld [vmem:[%s172 + $0xe0] sm:$0xff]
        %v205 = vld [vmem:[%s172 + $0xe8] sm:$0xff]
        %v206 = vld [vmem:[%s172 + $0xf0] sm:$0xff]
        %v207 = vld [vmem:[%s172 + $0xf8] sm:$0xff]
        %v208 = vld [vmem:[%s1] sm:$0xf]
        %v209 = vld [vmem:[%s1 + $0x4] sm:$0xf]
        %v210 = vld [vmem:[%s1 + $0x8] sm:$0xf]
        %v211 = vld [vmem:[%s1 + $0xc] sm:$0xf]
        %v212 = vld [vmem:[%s1 + $0x10] sm:$0xf]
        %v213 = vld [vmem:[%s1 + $0x14] sm:$0xf]
        %v214 = vld [vmem:[%s1 + $0x18] sm:$0xf]
        %v215 = vld [vmem:[%s1 + $0x1c] sm:$0xf]
        %v216 = vld [vmem:[%s1 + $0x20] sm:$0xf]
        %v217 = vld [vmem:[%s1 + $0x24] sm:$0xf]
        %v218 = vld [vmem:[%s1 + $0x28] sm:$0xf]
        %v219 = vld [vmem:[%s1 + $0x2c] sm:$0xf]
        %v220 = vld [vmem:[%s1 + $0x30] sm:$0xf]
        %v221 = vld [vmem:[%s1 + $0x34] sm:$0xf]
        %v222 = vld [vmem:[%s1 + $0x38] sm:$0xf]
        %v223 = vld [vmem:[%s1 + $0x3c] sm:$0xf]
        %v224 = vld [vmem:[%s1 + $0x40] sm:$0xf]
        %v225 = vld [vmem:[%s1 + $0x44] sm:$0xf]
        %v226 = vld [vmem:[%s1 + $0x48] sm:$0x3]
        %v227 = vld [vmem:[%s2] sm:$0x1]
        %v229 = vlaneseq
        %v230 = vshrl.u32 %v229, 7
        %v231 = vsub.s32 0, %v230
        %v232 = vrot.slane %v227, %v231
        %v266 = vunpack.c.l.b16 %v176
        %v267 = vunpack.c.h.b16 %v176
        %v268 = vunpack.c.l.b16 %v177
        %v269 = vunpack.c.h.b16 %v177
        %v270 = vunpack.c.l.b16 %v178
        %v271 = vunpack.c.h.b16 %v178
        %v272 = vunpack.c.l.b16 %v179
        %v273 = vunpack.c.h.b16 %v179
        %v274 = vunpack.c.l.b16 %v180
        %v275 = vunpack.c.h.b16 %v180
        %v276 = vunpack.c.l.b16 %v181
        %v277 = vunpack.c.h.b16 %v181
        %v278 = vunpack.c.l.b16 %v182
        %v279 = vunpack.c.h.b16 %v182
        %v280 = vunpack.c.l.b16 %v183
        %v281 = vunpack.c.h.b16 %v183
        %v282 = vunpack.c.l.b16 %v184
        %v283 = vunpack.c.h.b16 %v184
        %v284 = vunpack.c.l.b16 %v185
        %v285 = vunpack.c.h.b16 %v185
        %v286 = vunpack.c.l.b16 %v186
        %v287 = vunpack.c.h.b16 %v186
        %v288 = vunpack.c.l.b16 %v187
        %v289 = vunpack.c.h.b16 %v187
        %v290 = vunpack.c.l.b16 %v188
        %v291 = vunpack.c.h.b16 %v188
        %v292 = vunpack.c.l.b16 %v189
        %v293 = vunpack.c.h.b16 %v189
        %v294 = vunpack.c.l.b16 %v190
        %v295 = vunpack.c.h.b16 %v190
        %v296 = vunpack.c.l.b16 %v191
        %v297 = vunpack.c.h.b16 %v191
        %v298 = vunpack.c.l.b16 %v192
        %v299 = vunpack.c.h.b16 %v192
        %v300 = vunpack.c.l.b16 %v193
        %v301 = vunpack.c.h.b16 %v193
        %v302 = vunpack.c.l.b16 %v194
        %v303 = vunpack.c.h.b16 %v194
        %v304 = vunpack.c.l.b16 %v195
        %v305 = vunpack.c.h.b16 %v195
        %v306 = vunpack.c.l.b16 %v196
        %v307 = vunpack.c.h.b16 %v196
        %v308 = vunpack.c.l.b16 %v197
        %v309 = vunpack.c.h.b16 %v197
        %v310 = vunpack.c.l.b16 %v198
        %v311 = vunpack.c.h.b16 %v198
        %v312 = vunpack.c.l.b16 %v199
        %v313 = vunpack.c.h.b16 %v199
        %v314 = vunpack.c.l.b16 %v200
        %v315 = vunpack.c.h.b16 %v200
        %v316 = vunpack.c.l.b16 %v201
        %v317 = vunpack.c.h.b16 %v201
        %v318 = vunpack.c.l.b16 %v202
        %v319 = vunpack.c.h.b16 %v202
        %v320 = vunpack.c.l.b16 %v203
        %v321 = vunpack.c.h.b16 %v203
        %v322 = vunpack.c.l.b16 %v204
        %v323 = vunpack.c.h.b16 %v204
        %v324 = vunpack.c.l.b16 %v205
        %v325 = vunpack.c.h.b16 %v205
        %v326 = vunpack.c.l.b16 %v206
        %v327 = vunpack.c.h.b16 %v206
        %v328 = vunpack.c.l.b16 %v207
        %v329 = vunpack.c.h.b16 %v207
        %v330 = vpack.c.b16 %v268, %v266
        %v331 = vpack.c.b16 %v269, %v267
        %v332 = vpack.c.b16 %v272, %v270
        %v333 = vpack.c.b16 %v273, %v271
        %v334 = vpack.c.b16 %v276, %v274
        %v335 = vpack.c.b16 %v277, %v275
        %v336 = vpack.c.b16 %v280, %v278
        %v337 = vpack.c.b16 %v281, %v279
        %v338 = vpack.c.b16 %v284, %v282
        %v339 = vpack.c.b16 %v285, %v283
        %v340 = vpack.c.b16 %v288, %v286
        %v341 = vpack.c.b16 %v289, %v287
        %v342 = vpack.c.b16 %v292, %v290
        %v343 = vpack.c.b16 %v293, %v291
        %v344 = vpack.c.b16 %v296, %v294
        %v345 = vpack.c.b16 %v297, %v295
        %v346 = vpack.c.b16 %v300, %v298
        %v347 = vpack.c.b16 %v301, %v299
        %v348 = vpack.c.b16 %v304, %v302
        %v349 = vpack.c.b16 %v305, %v303
        %v350 = vpack.c.b16 %v308, %v306
        %v351 = vpack.c.b16 %v309, %v307
        %v352 = vpack.c.b16 %v312, %v310
        %v353 = vpack.c.b16 %v313, %v311
        %v354 = vpack.c.b16 %v316, %v314
        %v355 = vpack.c.b16 %v317, %v315
        %v356 = vpack.c.b16 %v320, %v318
        %v357 = vpack.c.b16 %v321, %v319
        %v358 = vpack.c.b16 %v324, %v322
        %v359 = vpack.c.b16 %v325, %v323
        %v360 = vpack.c.b16 %v328, %v326
        %v361 = vpack.c.b16 %v329, %v327
        %v397 = vunpack.c.l.b16 %v208
        %v398 = vunpack.c.l.b16 %v209
        %v399 = vunpack.c.l.b16 %v210
        %v400 = vunpack.c.l.b16 %v211
        %v401 = vunpack.c.l.b16 %v212
        %v402 = vunpack.c.l.b16 %v213
        %v403 = vunpack.c.l.b16 %v214
        %v404 = vunpack.c.l.b16 %v215
        %v405 = vunpack.c.l.b16 %v216
        %v406 = vunpack.c.l.b16 %v217
        %v407 = vunpack.c.l.b16 %v218
        %v408 = vunpack.c.l.b16 %v219
        %v409 = vunpack.c.l.b16 %v220
        %v410 = vunpack.c.l.b16 %v221
        %v411 = vunpack.c.l.b16 %v222
        %v412 = vunpack.c.l.b16 %v223
        %v413 = vunpack.c.l.b16 %v224
        %v414 = vunpack.c.l.b16 %v225
        %v415 = vunpack.c.l.b16 %v226
        %v416 = vpack.c.b16 %v398, %v397
        %v417 = vpack.c.b16 %v400, %v399
        %v418 = vpack.c.b16 %v402, %v401
        %v419 = vpack.c.b16 %v404, %v403
        %v420 = vpack.c.b16 %v406, %v405
        %v421 = vpack.c.b16 %v408, %v407
        %v422 = vpack.c.b16 %v410, %v409
        %v423 = vpack.c.b16 %v412, %v411
        %v424 = vpack.c.b16 %v414, %v413
        %v425 = vpack.c.b16 %v415, %v415
        %vm435 = vcmask 154624
        %v437 = vsel %vm435, %v331, 0
        %v440 = vsel %vm435, %v333, 0
        %v443 = vsel %vm435, %v335, 0
        %v446 = vsel %vm435, %v337, 0
        %v449 = vsel %vm435, %v339, 0
        %v452 = vsel %vm435, %v341, 0
        %v455 = vsel %vm435, %v343, 0
        %v458 = vsel %vm435, %v345, 0
        %v461 = vsel %vm435, %v347, 0
        %v464 = vsel %vm435, %v349, 0
        %v467 = vsel %vm435, %v351, 0
        %v470 = vsel %vm435, %v353, 0
        %v473 = vsel %vm435, %v355, 0
        %v476 = vsel %vm435, %v357, 0
        %v479 = vsel %vm435, %v359, 0
        %v482 = vsel %vm435, %v361, 0
        %vm484 = vcmask 1040384
        %vm485 = vcmask 1041408
        %v486 = vsel %vm484, 4294967295, 65535
        %v487 = vsel %vm485, %v486, 0
        %v489 = vand.u32 %v425, %v487
        %491 = vmatprep.subr.bf16.mxu0 0
        %492 = vmatpush1.bf16.msra.mxu0 %v416
        %493 = vmatprep.subr.bf16.mxu0 0
        %494 = vmatpush1.bf16.msra.mxu0 %v417
        %495 = vmatprep.subr.bf16.mxu0 0
        %496 = vmatpush1.bf16.msra.mxu0 %v418
        %497 = vmatprep.subr.bf16.mxu0 0
        %498 = vmatpush1.bf16.msra.mxu0 %v419
        %499 = vmatprep.subr.bf16.mxu0 0
        %500 = vmatpush1.bf16.msra.mxu0 %v420
        %501 = vmatprep.subr.bf16.mxu0 0
        %502 = vmatpush1.bf16.msra.mxu0 %v421
        %503 = vmatprep.subr.bf16.mxu0 0
        %504 = vmatpush1.bf16.msra.mxu0 %v422
        %505 = vmatprep.subr.bf16.mxu0 0
        %506 = vmatpush1.bf16.msra.mxu0 %v423
        %507 = vmatprep.subr.bf16.mxu0 0
        %508 = vmatpush1.bf16.msra.mxu0 %v424
        %509 = vmatprep.subr.bf16.mxu0 0
        %510 = vmatpush1.bf16.msra.mxu0 %v489
        %511 = vmatprep.subr.bf16.mxu0 0
        %512 = vmatpush1.bf16.msra.mxu0 0
        %513 = vmatprep.subr.bf16.mxu0 0
        %514 = vmatpush1.bf16.msra.mxu0 0
        %515 = vmatprep.subr.bf16.mxu0 0
        %516 = vmatpush1.bf16.msra.mxu0 0
        %517 = vmatprep.subr.bf16.mxu0 0
        %518 = vmatpush1.bf16.msra.mxu0 0
        %519 = vmatprep.subr.bf16.mxu0 0
        %520 = vmatpush1.bf16.msra.mxu0 0
        %521 = vmatprep.subr.bf16.mxu0 0
        %522 = vmatpush1.bf16.msra.mxu0 0
        %523 = vmatprep.mubr.bf16.mxu0 %v437
        %524 = vmatmul.mubr.bf16.gmra.mrb[0].mxu0 %v330
        %v525 = vpop.f32.mrb[0].mxu0
        %v526 = vadd.f32 %v232, %v525
        %v527 = vpop.f32.mrb[0].mxu0
        %v528 = vpop.f32.mrb[0].mxu0
        %v529 = vadd.f32 %v232, %v528
        %v530 = vpop.f32.mrb[0].mxu0
        %531 = vmatprep.mubr.bf16.mxu0 %v440
        %532 = vmatmul.mubr.bf16.gmra.mrb[0].mxu0 %v332
        %v533 = vpop.f32.mrb[0].mxu0
        %v534 = vadd.f32 %v232, %v533
        %v535 = vpop.f32.mrb[0].mxu0
        %v536 = vpop.f32.mrb[0].mxu0
        %v537 = vadd.f32 %v232, %v536
        %v538 = vpop.f32.mrb[0].mxu0
        %539 = vmatprep.mubr.bf16.mxu0 %v443
        %540 = vmatmul.mubr.bf16.gmra.mrb[0].mxu0 %v334
        %v541 = vpop.f32.mrb[0].mxu0
        %v542 = vadd.f32 %v232, %v541
        %v543 = vpop.f32.mrb[0].mxu0
        %v544 = vpop.f32.mrb[0].mxu0
        %v545 = vadd.f32 %v232, %v544
        %v546 = vpop.f32.mrb[0].mxu0
        %547 = vmatprep.mubr.bf16.mxu0 %v446
        %548 = vmatmul.mubr.bf16.gmra.mrb[0].mxu0 %v336
        %v549 = vpop.f32.mrb[0].mxu0
        %v550 = vadd.f32 %v232, %v549
        %v551 = vpop.f32.mrb[0].mxu0
        %v552 = vpop.f32.mrb[0].mxu0
        %v553 = vadd.f32 %v232, %v552
        %v554 = vpop.f32.mrb[0].mxu0
        %555 = vmatprep.mubr.bf16.mxu0 %v449
        %556 = vmatmul.mubr.bf16.gmra.mrb[0].mxu0 %v338
        %v557 = vpop.f32.mrb[0].mxu0
        %v558 = vadd.f32 %v232, %v557
        %v559 = vpop.f32.mrb[0].mxu0
        %v560 = vpop.f32.mrb[0].mxu0
        %v561 = vadd.f32 %v232, %v560
        %v562 = vpop.f32.mrb[0].mxu0
        %563 = vmatprep.mubr.bf16.mxu0 %v452
        %564 = vmatmul.mubr.bf16.gmra.mrb[0].mxu0 %v340
        %v565 = vpop.f32.mrb[0].mxu0
        %v566 = vadd.f32 %v232, %v565
        %v567 = vpop.f32.mrb[0].mxu0
        %v568 = vpop.f32.mrb[0].mxu0
        %v569 = vadd.f32 %v232, %v568
        %v570 = vpop.f32.mrb[0].mxu0
        %571 = vmatprep.mubr.bf16.mxu0 %v455
        %572 = vmatmul.mubr.bf16.gmra.mrb[0].mxu0 %v342
        %v573 = vpop.f32.mrb[0].mxu0
        %v574 = vadd.f32 %v232, %v573
        %v575 = vpop.f32.mrb[0].mxu0
        %v576 = vpop.f32.mrb[0].mxu0
        %v577 = vadd.f32 %v232, %v576
        %v578 = vpop.f32.mrb[0].mxu0
        %579 = vmatprep.mubr.bf16.mxu0 %v458
        %580 = vmatmul.mubr.bf16.gmra.mrb[0].mxu0 %v344
        %v581 = vpop.f32.mrb[0].mxu0
        %v582 = vadd.f32 %v232, %v581
        %v583 = vpop.f32.mrb[0].mxu0
        %v584 = vpop.f32.mrb[0].mxu0
        %v585 = vadd.f32 %v232, %v584
        %v586 = vpop.f32.mrb[0].mxu0
        %587 = vmatprep.mubr.bf16.mxu0 %v461
        %588 = vmatmul.mubr.bf16.gmra.mrb[0].mxu0 %v346
        %v589 = vpop.f32.mrb[0].mxu0
        %v590 = vadd.f32 %v232, %v589
        %v591 = vpop.f32.mrb[0].mxu0
        %v592 = vpop.f32.mrb[0].mxu0
        %v593 = vadd.f32 %v232, %v592
        %v594 = vpop.f32.mrb[0].mxu0
        %595 = vmatprep.mubr.bf16.mxu0 %v464
        %596 = vmatmul.mubr.bf16.gmra.mrb[0].mxu0 %v348
        %v597 = vpop.f32.mrb[0].mxu0
        %v598 = vadd.f32 %v232, %v597
        %v599 = vpop.f32.mrb[0].mxu0
        %v600 = vpop.f32.mrb[0].mxu0
        %v601 = vadd.f32 %v232, %v600
        %v602 = vpop.f32.mrb[0].mxu0
        %603 = vmatprep.mubr.bf16.mxu0 %v467
        %604 = vmatmul.mubr.bf16.gmra.mrb[0].mxu0 %v350
        %v605 = vpop.f32.mrb[0].mxu0
        %v606 = vadd.f32 %v232, %v605
        %v607 = vpop.f32.mrb[0].mxu0
        %v608 = vpop.f32.mrb[0].mxu0
        %v609 = vadd.f32 %v232, %v608
        %v610 = vpop.f32.mrb[0].mxu0
        %611 = vmatprep.mubr.bf16.mxu0 %v470
        %612 = vmatmul.mubr.bf16.gmra.mrb[0].mxu0 %v352
        %v613 = vpop.f32.mrb[0].mxu0
        %v614 = vadd.f32 %v232, %v613
        %v615 = vpop.f32.mrb[0].mxu0
        %v616 = vpop.f32.mrb[0].mxu0
        %v617 = vadd.f32 %v232, %v616
        %v618 = vpop.f32.mrb[0].mxu0
        %619 = vmatprep.mubr.bf16.mxu0 %v473
        %620 = vmatmul.mubr.bf16.gmra.mrb[0].mxu0 %v354
        %v621 = vpop.f32.mrb[0].mxu0
        %v622 = vadd.f32 %v232, %v621
        %v623 = vpop.f32.mrb[0].mxu0
        %v624 = vpop.f32.mrb[0].mxu0
        %v625 = vadd.f32 %v232, %v624
        %v626 = vpop.f32.mrb[0].mxu0
        %627 = vmatprep.mubr.bf16.mxu0 %v476
        %628 = vmatmul.mubr.bf16.gmra.mrb[0].mxu0 %v356
        %v629 = vpop.f32.mrb[0].mxu0
        %v630 = vadd.f32 %v232, %v629
        %v631 = vpop.f32.mrb[0].mxu0
        %v632 = vpop.f32.mrb[0].mxu0
        %v633 = vadd.f32 %v232, %v632
        %v634 = vpop.f32.mrb[0].mxu0
        %635 = vmatprep.mubr.bf16.mxu0 %v479
        %636 = vmatmul.mubr.bf16.gmra.mrb[0].mxu0 %v358
        %v637 = vpop.f32.mrb[0].mxu0
        %v638 = vadd.f32 %v232, %v637
        %v639 = vpop.f32.mrb[0].mxu0
        %v640 = vpop.f32.mrb[0].mxu0
        %v641 = vadd.f32 %v232, %v640
        %v642 = vpop.f32.mrb[0].mxu0
        %643 = vmatprep.mubr.bf16.mxu0 %v482
        %644 = vmatmul.mubr.bf16.gmra.mrb[0].mxu0 %v360
        %v645 = vpop.f32.mrb[0].mxu0
        %v646 = vadd.f32 %v232, %v645
        %v647 = vpop.f32.mrb[0].mxu0
        %v648 = vpop.f32.mrb[0].mxu0
        %v649 = vadd.f32 %v232, %v648
        %v650 = vpop.f32.mrb[0].mxu0
        %651 = vdwg.mxu0
        %v652 = vmax.f32 %v526, 0.0
        %v653 = vmax.f32 %v529, 0.0
        %v654 = vmax.f32 %v534, 0.0
        %v655 = vmax.f32 %v537, 0.0
        %v656 = vmax.f32 %v542, 0.0
        %v657 = vmax.f32 %v545, 0.0
        %v658 = vmax.f32 %v550, 0.0
        %v659 = vmax.f32 %v553, 0.0
        %v660 = vmax.f32 %v558, 0.0
        %v661 = vmax.f32 %v561, 0.0
        %v662 = vmax.f32 %v566, 0.0
        %v663 = vmax.f32 %v569, 0.0
        %v664 = vmax.f32 %v574, 0.0
        %v665 = vmax.f32 %v577, 0.0
        %v666 = vmax.f32 %v582, 0.0
        %v667 = vmax.f32 %v585, 0.0
        %v668 = vmax.f32 %v590, 0.0
        %v669 = vmax.f32 %v593, 0.0
        %v670 = vmax.f32 %v598, 0.0
        %v671 = vmax.f32 %v601, 0.0
        %v672 = vmax.f32 %v606, 0.0
        %v673 = vmax.f32 %v609, 0.0
        %v674 = vmax.f32 %v614, 0.0
        %v675 = vmax.f32 %v617, 0.0
        %v676 = vmax.f32 %v622, 0.0
        %v677 = vmax.f32 %v625, 0.0
        %v678 = vmax.f32 %v630, 0.0
        %v679 = vmax.f32 %v633, 0.0
        %v680 = vmax.f32 %v638, 0.0
        %v681 = vmax.f32 %v641, 0.0
        %v682 = vmax.f32 %v646, 0.0
        %v683 = vmax.f32 %v649, 0.0
        %v684 = vpack.c.bf16 %v653, %v652
        %v685 = vpack.c.bf16 %v655, %v654
        %v686 = vpack.c.bf16 %v657, %v656
        %v687 = vpack.c.bf16 %v659, %v658
        %v688 = vpack.c.bf16 %v661, %v660
        %v689 = vpack.c.bf16 %v663, %v662
        %v690 = vpack.c.bf16 %v665, %v664
        %v691 = vpack.c.bf16 %v667, %v666
        %v692 = vpack.c.bf16 %v669, %v668
        %v693 = vpack.c.bf16 %v671, %v670
        %v694 = vpack.c.bf16 %v673, %v672
        %v695 = vpack.c.bf16 %v675, %v674
        %v696 = vpack.c.bf16 %v677, %v676
        %v697 = vpack.c.bf16 %v679, %v678
        %v698 = vpack.c.bf16 %v681, %v680
        %v699 = vpack.c.bf16 %v683, %v682
        %v716 = vunpack.c.l.b16 %v684
        %v717 = vunpack.c.h.b16 %v684
        %v718 = vunpack.c.l.b16 %v685
        %v719 = vunpack.c.h.b16 %v685
        %v720 = vunpack.c.l.b16 %v686
        %v721 = vunpack.c.h.b16 %v686
        %v722 = vunpack.c.l.b16 %v687
        %v723 = vunpack.c.h.b16 %v687
        %v724 = vunpack.c.l.b16 %v688
        %v725 = vunpack.c.h.b16 %v688
        %v726 = vunpack.c.l.b16 %v689
        %v727 = vunpack.c.h.b16 %v689
        %v728 = vunpack.c.l.b16 %v690
        %v729 = vunpack.c.h.b16 %v690
        %v730 = vunpack.c.l.b16 %v691
        %v731 = vunpack.c.h.b16 %v691
        %v732 = vunpack.c.l.b16 %v692
        %v733 = vunpack.c.h.b16 %v692
        %v734 = vunpack.c.l.b16 %v693
        %v735 = vunpack.c.h.b16 %v693
        %v736 = vunpack.c.l.b16 %v694
        %v737 = vunpack.c.h.b16 %v694
        %v738 = vunpack.c.l.b16 %v695
        %v739 = vunpack.c.h.b16 %v695
        %v740 = vunpack.c.l.b16 %v696
        %v741 = vunpack.c.h.b16 %v696
        %v742 = vunpack.c.l.b16 %v697
        %v743 = vunpack.c.h.b16 %v697
        %v744 = vunpack.c.l.b16 %v698
        %v745 = vunpack.c.h.b16 %v698
        %v746 = vunpack.c.l.b16 %v699
        %v747 = vunpack.c.h.b16 %v699
        %v748 = vpack.c.b16 %v716, %v716
        %v749 = vpack.c.b16 %v717, %v717
        %v750 = vpack.c.b16 %v718, %v718
        %v751 = vpack.c.b16 %v719, %v719
        %v752 = vpack.c.b16 %v720, %v720
        %v753 = vpack.c.b16 %v721, %v721
        %v754 = vpack.c.b16 %v722, %v722
        %v755 = vpack.c.b16 %v723, %v723
        %v756 = vpack.c.b16 %v724, %v724
        %v757 = vpack.c.b16 %v725, %v725
        %v758 = vpack.c.b16 %v726, %v726
        %v759 = vpack.c.b16 %v727, %v727
        %v760 = vpack.c.b16 %v728, %v728
        %v761 = vpack.c.b16 %v729, %v729
        %v762 = vpack.c.b16 %v730, %v730
        %v763 = vpack.c.b16 %v731, %v731
        %v764 = vpack.c.b16 %v732, %v732
        %v765 = vpack.c.b16 %v733, %v733
        %v766 = vpack.c.b16 %v734, %v734
        %v767 = vpack.c.b16 %v735, %v735
        %v768 = vpack.c.b16 %v736, %v736
        %v769 = vpack.c.b16 %v737, %v737
        %v770 = vpack.c.b16 %v738, %v738
        %v771 = vpack.c.b16 %v739, %v739
        %v772 = vpack.c.b16 %v740, %v740
        %v773 = vpack.c.b16 %v741, %v741
        %v774 = vpack.c.b16 %v742, %v742
        %v775 = vpack.c.b16 %v743, %v743
        %v776 = vpack.c.b16 %v744, %v744
        %v777 = vpack.c.b16 %v745, %v745
        %v778 = vpack.c.b16 %v746, %v746
        %v779 = vpack.c.b16 %v747, %v747
        %vm812 = vcmask 519168
        %813 = vst.msk [vmem:[%s166] sm:$0xf] %vm812, %v748
        %814 = vst.msk [vmem:[%s166 + $0x4] sm:$0xf] %vm812, %v749
        %815 = vst.msk [vmem:[%s166 + $0x8] sm:$0xf] %vm812, %v750
        %816 = vst.msk [vmem:[%s166 + $0xc] sm:$0xf] %vm812, %v751
        %817 = vst.msk [vmem:[%s166 + $0x10] sm:$0xf] %vm812, %v752
        %818 = vst.msk [vmem:[%s166 + $0x14] sm:$0xf] %vm812, %v753
        %819 = vst.msk [vmem:[%s166 + $0x18] sm:$0xf] %vm812, %v754
        %820 = vst.msk [vmem:[%s166 + $0x1c] sm:$0xf] %vm812, %v755
        %821 = vst.msk [vmem:[%s166 + $0x20] sm:$0xf] %vm812, %v756
        %822 = vst.msk [vmem:[%s166 + $0x24] sm:$0xf] %vm812, %v757
        %823 = vst.msk [vmem:[%s166 + $0x28] sm:$0xf] %vm812, %v758
        %824 = vst.msk [vmem:[%s166 + $0x2c] sm:$0xf] %vm812, %v759
        %825 = vst.msk [vmem:[%s166 + $0x30] sm:$0xf] %vm812, %v760
        %826 = vst.msk [vmem:[%s166 + $0x34] sm:$0xf] %vm812, %v761
        %827 = vst.msk [vmem:[%s166 + $0x38] sm:$0xf] %vm812, %v762
        %828 = vst.msk [vmem:[%s166 + $0x3c] sm:$0xf] %vm812, %v763
        %829 = vst.msk [vmem:[%s166 + $0x40] sm:$0xf] %vm812, %v764
        %830 = vst.msk [vmem:[%s166 + $0x44] sm:$0xf] %vm812, %v765
        %831 = vst.msk [vmem:[%s166 + $0x48] sm:$0xf] %vm812, %v766
        %832 = vst.msk [vmem:[%s166 + $0x4c] sm:$0xf] %vm812, %v767
        %833 = vst.msk [vmem:[%s166 + $0x50] sm:$0xf] %vm812, %v768
        %834 = vst.msk [vmem:[%s166 + $0x54] sm:$0xf] %vm812, %v769
        %835 = vst.msk [vmem:[%s166 + $0x58] sm:$0xf] %vm812, %v770
        %836 = vst.msk [vmem:[%s166 + $0x5c] sm:$0xf] %vm812, %v771
        %837 = vst.msk [vmem:[%s166 + $0x60] sm:$0xf] %vm812, %v772
        %838 = vst.msk [vmem:[%s166 + $0x64] sm:$0xf] %vm812, %v773
        %839 = vst.msk [vmem:[%s166 + $0x68] sm:$0xf] %vm812, %v774
        %840 = vst.msk [vmem:[%s166 + $0x6c] sm:$0xf] %vm812, %v775
        %841 = vst.msk [vmem:[%s166 + $0x70] sm:$0xf] %vm812, %v776
        %842 = vst.msk [vmem:[%s166 + $0x74] sm:$0xf] %vm812, %v777
        %843 = vst.msk [vmem:[%s166 + $0x78] sm:$0xf] %vm812, %v778
        %844 = vst.msk [vmem:[%s166 + $0x7c] sm:$0xf] %vm812, %v779
        %s845 = sand.u32 %s93, 1
        %s846 = scalar_lea.sflag [#allocation3], %s845
        %s847 = sand.u32 %s93, 1
        %s848 = smul.addr %s847, 128
        %s849 = scalar_lea.vmem [#allocation2], %s848
        // Predicated region
        $region33: #{conv_bn_act.1} parent=31 // pred_check
          %p850 = pneg %p103
        $region34: #{conv_bn_act.1} parent=31 // pred_check_branch
          %852 = sbr.rel (%p850) target = $region36
        $region35: #{conv_bn_act.1} parent=31 // pred_region
          %s853 = smul.u32 32, %s17
          %s855 = ssub.s32 2048, 2048
          %856 = vsyncadd %s846, %s855
          %s857 = smul.addr %s853, 64
          %s858 = scalar_lea.hbm %s3, %s857
          %s859 = sshll.u32 %s849, 4
          %s860 = int_to_ptr.vmem [resolvable:$true] %s859
          %865 = dma.vmem_to_hbm [thread:$0]  %s860, 2048, %s858, %s846, 64, 64, 4
        $region36: #{conv_bn_act.1} parent=31 // pred_fallthru
          _
      $region32: #{conv_bn_act.1} parent=5 // pred_fallthru
        _
      %p866 = scmp.le.s32.totalorder 2, %s12
      // Predicated region
      $region37: #{conv_bn_act.1} parent=5 // pred_check
        %p867 = pneg %p866
      $region38: #{conv_bn_act.1} parent=5 // pred_check_branch
        %869 = sbr.rel (%p867) target = $region40
      $region39: #{conv_bn_act.1} parent=5 // pred_region
        %s870 = ssub.s32 %s12, 2
        // Predicated region
        $region41: #{conv_bn_act.1} parent=39 // pred_check
          %p871 = pneg %p109
        $region42: #{conv_bn_act.1} parent=39 // pred_check_branch
          %873 = sbr.rel (%p871) target = $region44
        $region43: #{conv_bn_act.1} parent=39 // pred_region
          %s874 = sand.u32 %s94, 1
          %s875 = scalar_lea.sflag [#allocation3], %s874
          %s876 = sand.u32 %s94, 1
          %s877 = smul.addr %s876, 128
          %s878 = scalar_lea.vmem [#allocation2], %s877
          %879 = dma.done %s875, 2048
        $region44: #{conv_bn_act.1} parent=39 // pred_fallthru
          _
      $region40: #{conv_bn_act.1} parent=5 // pred_fallthru
        _
    $region6: #{conv_bn_act.1} parent=1 // loop_footer
      %s16 = sadd.s32 1, %s12
    $region7: #{conv_bn_act.1} parent=1 // loop_footer_branch
      %11 = sbr.rel target = $region3
    $region8: #{conv_bn_act.1} parent=1 // loop_exit
      _
    %880 = vsyncpa [#allocation3], 1
    %s881 = scalar_lea.sflag [#allocation3], 1
    %882 = vsyncpa %s881, 1

</llo_original>
